<compile_context>
chip_gen: v5e
topology: v5e:2x2
jax: 0.10.0
libtpu: 0.0.40
codegen_flags: <defaults>
</compile_context>

<pallas_src>
import functools

import jax
import jax.numpy as jnp
from jax.experimental import pallas as pl
from jax.experimental.pallas import tpu as pltpu

LANE = 128              # vreg lane width (f32)
SUBLANE = 8             # vreg sublane height (f32)
DEFAULT_BLOCK_BATCH = 512   # replay-sized tiles: amortize ~0.35 us/grid-step overhead
MIN_SPLIT_ROWS = 128        # above this, force >= 2 grid tiles (v7x: feed both TCs)


def _round_up(n, m):
    return ((n + m - 1) // m) * m


def pack_params(w1, b1, w2, b2):
    """Pack (w1, b1, w2, b2) into a single lane-padded f32 slab.

    w1: (state_dim, hidden)   pre-transposed fc1 weight (y = x @ w1 + b1)
    b1: (1, hidden) or (hidden,)
    w2: (hidden, action_dim)  pre-transposed out weight
    b2: (1, action_dim) or (action_dim,)

    Returns (slab, meta).  Call once per parameter update and reuse; the hot
    path then DMAs exactly two operands (x tile + slab).
    """
    state_dim, hidden = w1.shape
    action_dim = w2.shape[1]
    b1 = jnp.reshape(b1, (1, hidden))
    b2 = jnp.reshape(b2, (1, action_dim))

    s_pad = _round_up(state_dim, SUBLANE)
    h_pad = _round_up(hidden, LANE)
    a_pad = _round_up(action_dim, LANE)
    width = max(h_pad, a_pad)

    w1_off = 0
    b1_off = s_pad                   # one 8-aligned sublane-group per bias row
    b2_off = s_pad + SUBLANE
    w2_off = s_pad + 2 * SUBLANE
    rows = w2_off + h_pad            # multiple of 8 by construction

    slab = jnp.zeros((rows, width), jnp.float32)
    slab = slab.at[w1_off:w1_off + state_dim, :hidden].set(w1.astype(jnp.float32))
    slab = slab.at[b1_off:b1_off + 1, :hidden].set(b1.astype(jnp.float32))
    slab = slab.at[b2_off:b2_off + 1, :action_dim].set(b2.astype(jnp.float32))
    slab = slab.at[w2_off:w2_off + hidden, :action_dim].set(w2.astype(jnp.float32))

    meta = dict(state_dim=state_dim, hidden=hidden, action_dim=action_dim,
                s_pad=s_pad, h_pad=h_pad, a_pad=a_pad, width=width,
                w1_off=w1_off, b1_off=b1_off, b2_off=b2_off, w2_off=w2_off,
                rows=rows)
    return slab, meta


def _net_kernel(x_ref, p_ref, o_ref, *, s_pad, h_pad, a_pad, action_dim,
                w1_off, b1_off, b2_off, w2_off):
    # x_ref: (tb, s_pad) batch tile.
    # p_ref: (rows, 128) parameter slab; constant index_map -> VMEM-resident.
    # o_ref: (tb, action_dim) narrow output block (full-array last dim).
    x = x_ref[...]
    w1 = p_ref[w1_off:w1_off + s_pad, 0:h_pad]
    b1 = p_ref[b1_off:b1_off + 1, 0:h_pad]
    b2 = p_ref[b2_off:b2_off + 1, 0:a_pad]
    w2 = p_ref[w2_off:w2_off + h_pad, 0:a_pad]

    # fc1 + ReLU: padded hidden columns have zero weight & bias -> stay zero.
    h = jnp.dot(x, w1, preferred_element_type=jnp.float32) + b1
    h = jnp.maximum(h, 0.0)
    # out layer, full-lane (a_pad) dot on the MXU; only the real action_dim
    # columns are stored, so HBM writeback is action_dim wide, not 128.
    y = jnp.dot(h, w2, preferred_element_type=jnp.float32) + b2
    o_ref[...] = y[:, :action_dim].astype(o_ref.dtype)


def _choose_batch_tile(batch, block_batch):
    """Pick an 8-aligned batch tile; split big batches across >= 2 grid steps."""
    bb = max(SUBLANE, _round_up(block_batch, SUBLANE))   # robustness: 8-align user tile
    b8 = _round_up(batch, SUBLANE)
    tb = min(bb, b8)
    if b8 >= MIN_SPLIT_ROWS and tb >= b8:
        # A single mega-tile would serialize all work on one TensorCore
        # (v7x has two); split the batch into at least two tiles.
        tb = _round_up((b8 + 1) // 2, SUBLANE)
    b_pad = _round_up(batch, tb)
    return tb, b_pad


def net_forward_packed(x, slab, meta, *, block_batch=DEFAULT_BLOCK_BATCH):
    """x: (B, state_dim) -> (B, action_dim) using a packed parameter slab."""
    batch, state_dim = x.shape
    assert state_dim == meta["state_dim"]
    s_pad = meta["s_pad"]
    action_dim = meta["action_dim"]

    tb, b_pad = _choose_batch_tile(batch, block_batch)
    num_tiles = b_pad // tb

    # Pad only when required (row pad for non-tile-aligned batches, column pad
    # for non-8-aligned state_dim).  For aligned inputs x goes straight to the
    # kernel with no extra HBM round trip.
    x_in = x.astype(jnp.float32)
    if b_pad != batch or s_pad != state_dim:
        x_in = jnp.pad(x_in, ((0, b_pad - batch), (0, s_pad - state_dim)))

    kernel = functools.partial(
        _net_kernel,
        s_pad=s_pad, h_pad=meta["h_pad"], a_pad=meta["a_pad"],
        action_dim=action_dim,
        w1_off=meta["w1_off"], b1_off=meta["b1_off"],
        b2_off=meta["b2_off"], w2_off=meta["w2_off"])

    out = pl.pallas_call(
        kernel,
        out_shape=jax.ShapeDtypeStruct((b_pad, action_dim), jnp.float32),
        grid=(num_tiles,),
        in_specs=[
            # Activations: one batch tile per grid step.
            pl.BlockSpec((tb, s_pad), lambda i: (i, 0)),
            # Parameters: constant block index -> fetched once, kept resident
            # in VMEM for every grid step (single DMA for all weights/biases).
            pl.BlockSpec((meta["rows"], meta["width"]), lambda i: (0, 0)),
        ],
        # Narrow output block: last dim equals the full array dim (action_dim),
        # second-last (tb) is 8-aligned -> satisfies the (8,128) rule while
        # writing ~32x fewer bytes than a 128-lane-padded output.
        out_specs=pl.BlockSpec((tb, action_dim), lambda i: (i, 0)),
        compiler_params=pltpu.CompilerParams(
            dimension_semantics=("parallel",)),  # megacore-shard batch tiles
    )(x_in, slab)

    return out[:batch]


def net_forward(x, w1, b1, w2, b2, *, block_batch=DEFAULT_BLOCK_BATCH):
    """Convenience wrapper: pack + run.  In a DQN act/learn loop, call
    pack_params once per parameter update and reuse net_forward_packed."""
    slab, meta = pack_params(w1, b1, w2, b2)
    return net_forward_packed(x, slab, meta, block_batch=block_batch)


def init_params(key, state_dim, action_dim, hidden=50):
    """Mimic the PyTorch __init__:
      fc1.weight ~ N(0, 0.1), fc1.bias ~ U(-1/sqrt(state_dim), 1/sqrt(state_dim))
      out.weight ~ N(0, 0.1), out.bias ~ U(-1/sqrt(hidden), 1/sqrt(hidden))
    Weights are stored transposed: (in, out)."""
    k1, k2, k3, k4 = jax.random.split(key, 4)
    w1 = 0.1 * jax.random.normal(k1, (state_dim, hidden), dtype=jnp.float32)
    bound1 = 1.0 / jnp.sqrt(jnp.float32(state_dim))
    b1 = jax.random.uniform(k2, (1, hidden), jnp.float32, -bound1, bound1)
    w2 = 0.1 * jax.random.normal(k3, (hidden, action_dim), dtype=jnp.float32)
    bound2 = 1.0 / jnp.sqrt(jnp.float32(hidden))
    b2 = jax.random.uniform(k4, (1, action_dim), jnp.float32, -bound2, bound2)
    return w1, b1, w2, b2


if __name__ == "__main__":
    state_dim = 16
    action_dim = 4

    key = jax.random.PRNGKey(0)
    kx1, kx2, kx3, kp = jax.random.split(key, 4)
    w1, b1, w2, b2 = init_params(kp, state_dim, action_dim)
    slab, meta = pack_params(w1, b1, w2, b2)

    def ref_fwd(x):
        return jnp.maximum(x @ w1 + b1, 0.0) @ w2 + b2

    # 1) act()-style batch: single 8-row tile, no padding copies at all.
    x_small = jax.random.normal(kx1, (8, state_dim), dtype=jnp.float32)
    out_small = net_forward_packed(x_small, slab, meta)
    jax.block_until_ready(out_small)
    assert out_small.shape == (8, action_dim)
    assert jnp.allclose(out_small, ref_fwd(x_small), atol=1e-5, rtol=1e-5)

    # 2) Non-aligned replay batch: 200 rows -> two 104-row tiles (>= 2 tiles so
    #    v7x can use both TensorCores); 8 padded rows are sliced off.
    x_mid = jax.random.normal(kx2, (200, state_dim), dtype=jnp.float32)
    out_mid = net_forward_packed(x_mid, slab, meta)
    jax.block_until_ready(out_mid)
    assert out_mid.shape == (200, action_dim)
    assert jnp.allclose(out_mid, ref_fwd(x_mid), atol=1e-5, rtol=1e-5)

    # 3) Large replay batch exercising the default 512-row tile (2 grid steps,
    #    24 padded rows sliced off).
    x_big = jax.random.normal(kx3, (1000, state_dim), dtype=jnp.float32)
    out_big = net_forward_packed(x_big, slab, meta)
    jax.block_until_ready(out_big)
    assert out_big.shape == (1000, action_dim)
    assert jnp.allclose(out_big, ref_fwd(x_big), atol=1e-5, rtol=1e-5)

    print("KERNEL_OK")
</pallas_src>

<mosaic_0001>
module attributes {stable_mosaic.version = 11 : i64} {
  func.func @_net_kernel(%arg0: i32, %arg1: memref<8x16xf32, #tpu.memory_space<vmem>>, %arg2: memref<160x128xf32, #tpu.memory_space<vmem>>, %arg3: memref<8x4xf32, #tpu.memory_space<vmem>>) attributes {dimension_semantics = [#tpu.dimension_semantics<parallel>], iteration_bounds = array<i64: 1>, scalar_prefetch = 0 : i64, scratch_operands = 0 : i64, tpu.core_type = #tpu.core_type<tc>, window_params = [{transform_indices = @transform_0, window_bounds = array<i64: 8, 16>}, {pipeline_mode = #tpu.pipeline_mode<synchronous>, transform_indices = @transform_1, window_bounds = array<i64: 160, 128>}, {transform_indices = @transform_2, window_bounds = array<i64: 8, 4>}]} {
    %c0 = arith.constant 0 : index
    %c0_0 = arith.constant 0 : index
    %0 = vector.load %arg1[%c0, %c0_0] : memref<8x16xf32, #tpu.memory_space<vmem>>, vector<8x16xf32>
    %c0_1 = arith.constant 0 : index
    %c0_2 = arith.constant 0 : index
    %1 = vector.load %arg2[%c0_1, %c0_2] : memref<160x128xf32, #tpu.memory_space<vmem>>, vector<16x128xf32>
    %c16 = arith.constant 16 : index
    %c0_3 = arith.constant 0 : index
    %2 = vector.load %arg2[%c16, %c0_3] : memref<160x128xf32, #tpu.memory_space<vmem>>, vector<1x128xf32>
    %c24 = arith.constant 24 : index
    %c0_4 = arith.constant 0 : index
    %3 = vector.load %arg2[%c24, %c0_4] : memref<160x128xf32, #tpu.memory_space<vmem>>, vector<1x128xf32>
    %c32 = arith.constant 32 : index
    %c0_5 = arith.constant 0 : index
    %4 = vector.load %arg2[%c32, %c0_5] : memref<160x128xf32, #tpu.memory_space<vmem>>, vector<128x128xf32>
    %cst = arith.constant dense<0.000000e+00> : vector<8x128xf32>
    %5 = tpu.matmul %0, %1, %cst {dimension_numbers = #tpu.dot_dimension_numbers<[1], [0], [0], [1], [0, 0, 1, 1], [], []>} : vector<8x16xf32>, vector<16x128xf32>, vector<8x128xf32> -> vector<8x128xf32>
    %6 = vector.broadcast %2 : vector<1x128xf32> to vector<8x128xf32>
    %7 = arith.addf %5, %6 : vector<8x128xf32>
    %cst_6 = arith.constant 0.000000e+00 : f32
    %8 = vector.broadcast %cst_6 : f32 to vector<8x128xf32>
    %9 = arith.maximumf %7, %8 : vector<8x128xf32>
    %cst_7 = arith.constant dense<0.000000e+00> : vector<8x128xf32>
    %10 = tpu.matmul %9, %4, %cst_7 {dimension_numbers = #tpu.dot_dimension_numbers<[1], [0], [0], [1], [0, 0, 1, 1], [], []>} : vector<8x128xf32>, vector<128x128xf32>, vector<8x128xf32> -> vector<8x128xf32>
    %11 = vector.broadcast %3 : vector<1x128xf32> to vector<8x128xf32>
    %12 = arith.addf %10, %11 : vector<8x128xf32>
    %13 = vector.extract_strided_slice %12 {offsets = [0, 0], sizes = [8, 4], strides = [1, 1]} : vector<8x128xf32> to vector<8x4xf32>
    %c0_8 = arith.constant 0 : index
    %c0_9 = arith.constant 0 : index
    %14 = vector.load %arg3[%c0_8, %c0_9] : memref<8x4xf32, #tpu.memory_space<vmem>>, vector<8x4xf32>
    tpu.vector_store %arg3[%c0_8, %c0_9], %13 {strides = array<i32>} : memref<8x4xf32, #tpu.memory_space<vmem>>, vector<8x4xf32>,
    return
  }
  func.func @transform_0(%arg0: i32) -> (i32, i32) {
    %c0_i32 = arith.constant 0 : i32
    %c0_i32_0 = arith.constant 0 : i32
    return %arg0, %c0_i32 : i32, i32
  }
  func.func @transform_1(%arg0: i32) -> (i32, i32) {
    %c0_i32 = arith.constant 0 : i32
    %c0_i32_0 = arith.constant 0 : i32
    %c0_i32_1 = arith.constant 0 : i32
    return %c0_i32, %c0_i32_0 : i32, i32
  }
  func.func @transform_2(%arg0: i32) -> (i32, i32) {
    %c0_i32 = arith.constant 0 : i32
    %c0_i32_0 = arith.constant 0 : i32
    return %arg0, %c0_i32 : i32, i32
  }
}

</mosaic_0001>

<llo_original>
// kernel: tpu_custom_call.1
$region0: #{tpu_custom_call.1}
  #allocation0 [shape = 'u32[]', space=smem, size = 0x4, offset = 0x4, fixed_abs, tag = 'smem constant byte address 0x4 - core index']
  #allocation1 [shape = 'u32[72,128]{1,0:T(1,128)}', space=vmem, size = 0x9000, scoped, tag = 'internal scratch']
  %s0 = inlined_call_operand.hbm [shape: f32[8,16], index: 0, kind: input, shape index: {}]
  %s1 = inlined_call_operand.hbm [shape: f32[160,128], index: 1, kind: input, shape index: {}]
  %s2 = inlined_call_operand.vmem [shape: f32[8,4], index: 2, kind: output, shape index: {}]
  %s3 = sld [smem:[#allocation0]]
  $region26: #{tpu_custom_call.1} parent=0
    _
  %s5 = ssub.s32 1, %s3
  %s6 = scalar_select 0, %s5, %s3
  $region1: #{tpu_custom_call.1} parent=0
    #allocation2 [shape = 'u8[4096]{0}', space=vmem, size = 0x1000, scoped, tag = 'input window, operand 0, single buffered']
    #allocation3 [shape = 's32[1]{0}', space=sflag, size = 0x4, scoped, tag = 'scoped memory for tpu_custom_call.1']
    #allocation4 [shape = 'u8[81920]{0}', space=vmem, size = 0x14000, scoped, tag = 'input window, operand 1, single buffered']
    #allocation5 [shape = 's32[1]{0}', space=sflag, size = 0x4, scoped, tag = 'scoped memory for tpu_custom_call.1']
    %7 = vsyncpa [#allocation3], 0
    %8 = vsyncpa [#allocation5], 0
    // Predicated region
    $region2: #{tpu_custom_call.1} parent=1 // pred_check
      _
    $region3: #{tpu_custom_call.1} parent=1 // pred_check_branch
      %10 = sbr.rel (0) target = $region5
    $region4: #{tpu_custom_call.1} parent=1 // pred_region
      %12 = vsyncadd [#allocation3], 0
      %s14 = sshll.u32 %s0, 4
      %s15 = int_to_ptr.hbm [resolvable:$true] %s14
      %s16 = sshll.u32 [#allocation2], 4
      %s17 = int_to_ptr.vmem [resolvable:$true] %s16
      %19 = dma.hbm_to_vmem [thread:$0]  %s15, 128, %s17, [#allocation3]
    $region5: #{tpu_custom_call.1} parent=1 // pred_fallthru
      _
    // Predicated region
    $region6: #{tpu_custom_call.1} parent=1 // pred_check
      _
    $region7: #{tpu_custom_call.1} parent=1 // pred_check_branch
      %21 = sbr.rel (0) target = $region9
    $region8: #{tpu_custom_call.1} parent=1 // pred_region
      %23 = vsyncadd [#allocation5], 0
      %s24 = sshll.u32 %s1, 4
      %s25 = int_to_ptr.hbm [resolvable:$true] %s24
      %s26 = sshll.u32 [#allocation4], 4
      %s27 = int_to_ptr.vmem [resolvable:$true] %s26
      %32 = dma.hbm_to_vmem [thread:$0]  %s25, 2560, %s27, [#allocation5], 128, 128, 8
    $region9: #{tpu_custom_call.1} parent=1 // pred_fallthru
      _
    // Predicated region
    $region10: #{tpu_custom_call.1} parent=1 // pred_check
      _
    $region11: #{tpu_custom_call.1} parent=1 // pred_check_branch
      %34 = sbr.rel (0) target = $region13
    $region12: #{tpu_custom_call.1} parent=1 // pred_region
      %36 = dma.done [#allocation3], 128
    $region13: #{tpu_custom_call.1} parent=1 // pred_fallthru
      _
    // Predicated region
    $region14: #{tpu_custom_call.1} parent=1 // pred_check
      _
    $region15: #{tpu_custom_call.1} parent=1 // pred_check_branch
      %38 = sbr.rel (0) target = $region17
    $region16: #{tpu_custom_call.1} parent=1 // pred_region
      %40 = dma.done [#allocation5], 2560
    $region17: #{tpu_custom_call.1} parent=1 // pred_fallthru
      _
    %v41 = vld [vmem:[#allocation2] sm:$0xff]
    %v42 = vld [vmem:[#allocation4] sm:$0xff]
    %v43 = vld [vmem:[#allocation4 + $0x8] sm:$0xff]
    %v44 = vld [vmem:[#allocation4 + $0x10] sm:$0x1]
    %v45 = vld [vmem:[#allocation4 + $0x18] sm:$0x1]
    %v46 = vld [vmem:[#allocation4 + $0x20] sm:$0xff]
    %v47 = vld [vmem:[#allocation4 + $0x28] sm:$0xff]
    %v48 = vld [vmem:[#allocation4 + $0x30] sm:$0xff]
    %v49 = vld [vmem:[#allocation4 + $0x38] sm:$0xff]
    %v50 = vld [vmem:[#allocation4 + $0x40] sm:$0xff]
    %v51 = vld [vmem:[#allocation4 + $0x48] sm:$0xff]
    %v52 = vld [vmem:[#allocation4 + $0x50] sm:$0xff]
    %v53 = vld [vmem:[#allocation4 + $0x58] sm:$0xff]
    %v54 = vld [vmem:[#allocation4 + $0x60] sm:$0xff]
    %v55 = vld [vmem:[#allocation4 + $0x68] sm:$0xff]
    %v56 = vld [vmem:[#allocation4 + $0x70] sm:$0xff]
    %v57 = vld [vmem:[#allocation4 + $0x78] sm:$0xff]
    %v58 = vld [vmem:[#allocation4 + $0x80] sm:$0xff]
    %v59 = vld [vmem:[#allocation4 + $0x88] sm:$0xff]
    %v60 = vld [vmem:[#allocation4 + $0x90] sm:$0xff]
    %v61 = vld [vmem:[#allocation4 + $0x98] sm:$0xff]
    %v62 = vperm.slane %v44, 0
    %vm63 = vcmask 130048
    %v65 = vsel %vm63, %v41, 0
    %67 = vmatpush.msra.mxu0 0.0
    %68 = vmatpush.msra.mxu0 0.0
    %69 = vmatpush.msra.mxu0 0.0
    %70 = vmatpush.msra.mxu0 0.0
    %71 = vmatpush.msra.mxu0 0.0
    %72 = vmatpush.msra.mxu0 0.0
    %73 = vmatpush.msra.mxu0 0.0
    %74 = vmatpush.msra.mxu0 0.0
    %75 = vmatpush.msra.mxu0 0.0
    %76 = vmatpush.msra.mxu0 0.0
    %77 = vmatpush.msra.mxu0 0.0
    %78 = vmatpush.msra.mxu0 0.0
    %79 = vmatpush.msra.mxu0 0.0
    %80 = vmatpush.msra.mxu0 0.0
    %81 = vmatpush.msra.mxu0 %v43
    %82 = vmatpush.msra.mxu0 %v42
    %83 = vmatmul.f32.gmra.mxu0 %v65
    %v84 = vpop.f32.mrf.mxu0
    %v85 = vadd.f32 %v62, %v84
    %86 = vdwg.mxu0
    %v87 = vmax.f32 %v85, 0.0
    %v88 = vperm.slane %v45, 0
    %89 = vmatpush.msra.mxu0 %v61
    %90 = vmatpush.msra.mxu0 %v60
    %91 = vmatpush.msra.mxu0 %v59
    %92 = vmatpush.msra.mxu0 %v58
    %93 = vmatpush.msra.mxu0 %v57
    %94 = vmatpush.msra.mxu0 %v56
    %95 = vmatpush.msra.mxu0 %v55
    %96 = vmatpush.msra.mxu0 %v54
    %97 = vmatpush.msra.mxu0 %v53
    %98 = vmatpush.msra.mxu0 %v52
    %99 = vmatpush.msra.mxu0 %v51
    %100 = vmatpush.msra.mxu0 %v50
    %101 = vmatpush.msra.mxu0 %v49
    %102 = vmatpush.msra.mxu0 %v48
    %103 = vmatpush.msra.mxu0 %v47
    %104 = vmatpush.msra.mxu0 %v46
    %105 = vmatmul.f32.gmra.mxu0 %v87
    %v106 = vpop.f32.mrf.mxu0
    %v107 = vadd.f32 %v88, %v106
    %108 = vdwg.mxu0
    %vm109 = vcmask 31744
    %110 = vst.msk [vmem:[%s2] sm:$0xff] %vm109, %v107
    // Predicated region
    $region18: #{tpu_custom_call.1} parent=1 // pred_check
      _
    $region19: #{tpu_custom_call.1} parent=1 // pred_check_branch
      %112 = sbr.rel (0) target = $region21
    $region20: #{tpu_custom_call.1} parent=1 // pred_region
      _
    $region21: #{tpu_custom_call.1} parent=1 // pred_fallthru
      _
    // Predicated region
    $region22: #{tpu_custom_call.1} parent=1 // pred_check
      _
    $region23: #{tpu_custom_call.1} parent=1 // pred_check_branch
      %114 = sbr.rel (0) target = $region25
    $region24: #{tpu_custom_call.1} parent=1 // pred_region
      _
    $region25: #{tpu_custom_call.1} parent=1 // pred_fallthru
      _
    %115 = vsyncpa [#allocation3], 1
    %116 = vsyncpa [#allocation5], 1

</llo_original>
